<compile_context>
chip_gen: v7x
topology: tpu7x:2x2x1
jax: 0.10.0
libtpu: 0.0.40
codegen_flags: <defaults>
</compile_context>

<pallas_src>
import functools
import math

import jax
import jax.numpy as jnp
from jax import lax
from jax.experimental import pallas as pl
from jax.experimental.pallas import tpu as pltpu

_LANES = 128
_SUBLANES = 8
_EXP_NEG_100 = float(math.exp(-100.0))   # exp of PyTorch's -100 log clamp


def _focal_loss_tile_kernel(p_ref, t_ref, out_ref, *, alpha, gamma,
                            rows_total, tile_rows, chunk_rows,
                            blocks_per_shard, needs_mask, binary_targets):
    s = pl.program_id(0)   # shard axis ("parallel": both TCs on v7x)
    i = pl.program_id(1)   # sequential steps within a shard ("arbitrary")

    @pl.when(i == 0)
    def _():
        out_ref[...] = jnp.zeros_like(out_ref)

    # Logical (unclamped) block index -> first global row of this tile.
    tile_row0 = (s * blocks_per_shard + i) * tile_rows

    g_int = int(gamma)
    gamma_is_int = float(gamma) == float(g_int) and g_int >= 0

    def chunk_partial(row_off, nrows):
        """(8,128) partial sum over tile rows [row_off, row_off+nrows)."""
        p = p_ref[pl.ds(row_off, nrows), :].astype(jnp.float32)
        t = t_ref[pl.ds(row_off, nrows), :].astype(jnp.float32)

        if binary_targets:
            # Hard {0,1}-target fast path: 1 transcendental/element vs 3.
            # Matches the general path (incl. the -100 clamp) exactly for
            # t in {0,1}.
            pt_raw = t * p + (1.0 - t) * (1.0 - p)
            bce = jnp.minimum(-jnp.log(pt_raw), 100.0)
            pt = jnp.maximum(pt_raw, jnp.float32(_EXP_NEG_100))
        else:
            # PyTorch binary_cross_entropy clamps log terms at -100.
            log_p = jnp.maximum(jnp.log(p), -100.0)
            log_1mp = jnp.maximum(jnp.log(1.0 - p), -100.0)
            bce = -(t * log_p + (1.0 - t) * log_1mp)
            pt = jnp.exp(-bce)

        one_m_pt = 1.0 - pt
        if gamma_is_int:
            # Unrolled integer power: pure VPU multiplies (no EUP exp/log).
            w = jnp.ones_like(one_m_pt) if g_int == 0 else one_m_pt
            for _ in range(g_int - 1):
                w = w * one_m_pt
        else:
            w = one_m_pt ** jnp.float32(gamma)
        f_loss = alpha * w * bce

        if needs_mask:
            # Single post-compute select zeroes overhang / clamped-duplicate
            # rows; select (not multiply) so stale-data NaNs can't propagate.
            row_ids = tile_row0 + row_off + lax.broadcasted_iota(
                jnp.int32, (nrows, _LANES), 0)
            f_loss = jnp.where(row_ids < rows_total, f_loss, 0.0)

        # Per-chunk reduce stays on the VPU into a vreg-shaped (8,128) partial;
        # the expensive cross-lane reduce happens once, in the wrapper.
        return f_loss.reshape(nrows // _SUBLANES, _SUBLANES, _LANES).sum(axis=0)

    # Chunked accumulation bounds live temporaries even at tile_rows=4096.
    n_full = tile_rows // chunk_rows            # >= 1 (chunk_rows <= tile_rows)
    rem = tile_rows - n_full * chunk_rows       # multiple of 8

    def body(c, acc):
        r0 = pl.multiple_of(c * chunk_rows, chunk_rows)
        return acc + chunk_partial(r0, chunk_rows)

    acc = lax.fori_loop(0, n_full, body,
                        jnp.zeros((_SUBLANES, _LANES), jnp.float32),
                        unroll=True)
    if rem > 0:
        acc = acc + chunk_partial(n_full * chunk_rows, rem)
    out_ref[...] += acc


def _focal_elementwise(p, t, alpha, gamma):
    p = p.astype(jnp.float32)
    t = t.astype(jnp.float32)
    log_p = jnp.maximum(jnp.log(p), -100.0)
    log_1mp = jnp.maximum(jnp.log(1.0 - p), -100.0)
    bce = -(t * log_p + (1.0 - t) * log_1mp)
    pt = jnp.exp(-bce)
    return alpha * (1.0 - pt) ** gamma * bce


def _default_num_shards():
    # The size-2 "parallel" leading axis only pays on dual-TensorCore chips
    # (v7x).  On single-TC v5e/v6e it just doubles the grid, forces the ragged
    # mask more often and can duplicate a clamped-block DMA, so default to 1.
    try:
        kind = jax.devices()[0].device_kind.lower()
    except Exception:
        return 1
    return 2 if "v7" in kind else 1


def focal_loss(inputs, targets, *, alpha=0.25, gamma=2, reduce=True,
               tile_rows_max=4096, chunk_rows_max=512, num_shards=None,
               assume_binary_targets=False):
    """inputs/targets: NCHW probabilities in [0,1] (logits=False path).

    Targets may be any real dtype holding values in [0,1] (e.g. int8/bf16
    {0,1} labels); the kernel upcasts in-register, so no wrapper cast (and no
    extra HBM pass) is added.
    """
    # TODO(synk): logits=True path (binary_cross_entropy_with_logits) not
    # implemented in the kernel; this head uses logits=False.
    assert inputs.shape == targets.shape
    n_total = inputs.size

    if not reduce:
        # TODO(synk): reduce=False (per-element loss map) handled in plain JAX;
        # the hot path (reduce=True) is the Pallas kernel below.
        return _focal_elementwise(inputs, targets, alpha, gamma)

    flat_p = inputs.reshape(-1)
    flat_t = targets.reshape(-1)

    # Main lane-dense slab: (rows, 128) with rows a multiple of 8 -- a pure
    # reshape, no padded HBM copy.  The small (< 8*128 element) remainder is
    # summed in plain JAX.
    rows = (n_total // _LANES) // _SUBLANES * _SUBLANES
    main = rows * _LANES

    total = jnp.float32(0.0)
    if rows > 0:
        p2d = lax.slice(flat_p, (0,), (main,)).reshape(rows, _LANES)
        t2d = lax.slice(flat_t, (0,), (main,)).reshape(rows, _LANES)

        tile_rows = min(rows, int(tile_rows_max))        # multiple of 8
        chunk_rows = min(tile_rows, int(chunk_rows_max))  # multiple of 8
        total_blocks = pl.cdiv(rows, tile_rows)
        if num_shards is None:
            num_shards = _default_num_shards()
        num_shards = max(1, min(int(num_shards), total_blocks))
        blocks_per_shard = pl.cdiv(total_blocks, num_shards)
        needs_mask = (num_shards * blocks_per_shard * tile_rows) != rows

        def in_index_map(si, bi):
            # Clamp so the DMA never targets a block past the array; the
            # in-kernel mask (from the *unclamped* index) zeroes any
            # duplicated / overhanging rows.
            b = si * blocks_per_shard + bi
            return (jnp.minimum(b, total_blocks - 1), 0)

        kernel = functools.partial(
            _focal_loss_tile_kernel,
            alpha=float(alpha), gamma=gamma, rows_total=rows,
            tile_rows=tile_rows, chunk_rows=chunk_rows,
            blocks_per_shard=blocks_per_shard, needs_mask=needs_mask,
            binary_targets=bool(assume_binary_targets))

        partial = pl.pallas_call(
            kernel,
            out_shape=jax.ShapeDtypeStruct(
                (num_shards * _SUBLANES, _LANES), jnp.float32),
            grid_spec=pltpu.PrefetchScalarGridSpec(
                num_scalar_prefetch=0,
                grid=(num_shards, blocks_per_shard),
                in_specs=[
                    pl.BlockSpec((tile_rows, _LANES), in_index_map),
                    pl.BlockSpec((tile_rows, _LANES), in_index_map),
                ],
                out_specs=pl.BlockSpec(
                    (_SUBLANES, _LANES), lambda si, bi: (si, 0)),
            ),
            compiler_params=pltpu.CompilerParams(
                dimension_semantics=("parallel", "arbitrary")),
        )(p2d, t2d)
        total = total + jnp.sum(partial)

    if main < n_total:
        tail_p = lax.slice(flat_p, (main,), (n_total,))
        tail_t = lax.slice(flat_t, (main,), (n_total,))
        total = total + jnp.sum(_focal_elementwise(tail_p, tail_t, alpha, gamma))

    return total / jnp.float32(n_total)


def _ref_focal_loss(inputs, targets, alpha=0.25, gamma=2):
    return jnp.mean(_focal_elementwise(inputs, targets, alpha, gamma))


if __name__ == "__main__":
    key = jax.random.PRNGKey(0)
    k1, k2 = jax.random.split(key)
    # NCHW probabilities (logits=False default) and binary targets.
    x = jax.random.uniform(k1, (2, 4, 16, 16), dtype=jnp.float32,
                           minval=1e-4, maxval=1.0 - 1e-4)
    t = (jax.random.uniform(k2, (2, 4, 16, 16)) > 0.5).astype(jnp.float32)

    ref = _ref_focal_loss(x, t)

    # Default (soft-target-safe, 3-transcendental) path.
    loss = jax.block_until_ready(focal_loss(x, t))
    assert jnp.allclose(loss, ref, rtol=1e-5, atol=1e-6), (loss, ref)

    # Binary-target fast path (1 transcendental/element) -- identical result
    # for hard {0,1} targets.
    loss_fast = jax.block_until_ready(
        focal_loss(x, t, assume_binary_targets=True))
    assert jnp.allclose(loss_fast, ref, rtol=1e-5, atol=1e-6), (loss_fast, ref)

    print("KERNEL_OK")
</pallas_src>

<mosaic_0001>
module attributes {stable_mosaic.version = 11 : i64} {
  func.func @_focal_loss_tile_kernel(%arg0: i32, %arg1: i32, %arg2: memref<16x128xf32, #tpu.memory_space<vmem>>, %arg3: memref<16x128xf32, #tpu.memory_space<vmem>>, %arg4: memref<8x128xf32, #tpu.memory_space<vmem>>) attributes {dimension_semantics = [#tpu.dimension_semantics<parallel>, #tpu.dimension_semantics<arbitrary>], iteration_bounds = array<i64: 1, 1>, scalar_prefetch = 0 : i64, scratch_operands = 0 : i64, tpu.core_type = #tpu.core_type<tc>, window_params = [{transform_indices = @transform_0, window_bounds = array<i64: 16, 128>}, {transform_indices = @transform_1, window_bounds = array<i64: 16, 128>}, {transform_indices = @transform_2, window_bounds = array<i64: 8, 128>}]} {
    %c0_i32 = arith.constant 0 : i32
    %0 = arith.cmpi eq, %arg1, %c0_i32 : i32
    %1 = arith.extui %0 : i1 to i32
    %c0_i32_0 = arith.constant 0 : i32
    %2 = arith.cmpi ne, %1, %c0_i32_0 : i32
    scf.if %2 {
      %cst_16 = arith.constant 0.000000e+00 : f32
      %40 = vector.broadcast %cst_16 : f32 to vector<8x128xf32>
      %c0_17 = arith.constant 0 : index
      %c0_18 = arith.constant 0 : index
      %41 = vector.load %arg4[%c0_17, %c0_18] : memref<8x128xf32, #tpu.memory_space<vmem>>, vector<8x128xf32>
      tpu.vector_store %arg4[%c0_17, %c0_18], %40 {strides = array<i32>} : memref<8x128xf32, #tpu.memory_space<vmem>>, vector<8x128xf32>,
    } else {
    }
    %cst = arith.constant 0.000000e+00 : f32
    %3 = vector.broadcast %cst : f32 to vector<8x128xf32>
    %c0_i32_1 = arith.constant 0 : i32
    %c16_i32 = arith.constant 16 : i32
    %4 = arith.muli %c0_i32_1, %c16_i32 : i32
    %5 = tpu.assume_multiple %4, 16 : i32
    %6 = arith.index_cast %5 : i32 to index
    %c0 = arith.constant 0 : index
    %7 = vector.load %arg2[%6, %c0] : memref<16x128xf32, #tpu.memory_space<vmem>>, vector<16x128xf32>
    %8 = arith.index_cast %5 : i32 to index
    %c0_2 = arith.constant 0 : index
    %9 = vector.load %arg3[%8, %c0_2] : memref<16x128xf32, #tpu.memory_space<vmem>>, vector<16x128xf32>
    %10 = math.log %7 : vector<16x128xf32>
    %cst_3 = arith.constant -1.000000e+02 : f32
    %11 = vector.broadcast %cst_3 : f32 to vector<16x128xf32>
    %12 = arith.maximumf %10, %11 : vector<16x128xf32>
    %cst_4 = arith.constant 1.000000e+00 : f32
    %13 = vector.broadcast %cst_4 : f32 to vector<16x128xf32>
    %14 = arith.subf %13, %7 : vector<16x128xf32>
    %15 = math.log %14 : vector<16x128xf32>
    %cst_5 = arith.constant -1.000000e+02 : f32
    %16 = vector.broadcast %cst_5 : f32 to vector<16x128xf32>
    %17 = arith.maximumf %15, %16 : vector<16x128xf32>
    %18 = arith.mulf %9, %12 : vector<16x128xf32>
    %cst_6 = arith.constant 1.000000e+00 : f32
    %19 = vector.broadcast %cst_6 : f32 to vector<16x128xf32>
    %20 = arith.subf %19, %9 : vector<16x128xf32>
    %21 = arith.mulf %20, %17 : vector<16x128xf32>
    %22 = arith.addf %18, %21 : vector<16x128xf32>
    %cst_7 = arith.constant 0.000000e+00 : f32
    %23 = vector.broadcast %cst_7 : f32 to vector<16x128xf32>
    %24 = arith.subf %23, %22 : vector<16x128xf32>
    %cst_8 = arith.constant 0.000000e+00 : f32
    %25 = vector.broadcast %cst_8 : f32 to vector<16x128xf32>
    %26 = arith.subf %25, %24 : vector<16x128xf32>
    %27 = math.exp %26 : vector<16x128xf32>
    %cst_9 = arith.constant 1.000000e+00 : f32
    %28 = vector.broadcast %cst_9 : f32 to vector<16x128xf32>
    %29 = arith.subf %28, %27 : vector<16x128xf32>
    %30 = arith.mulf %29, %29 : vector<16x128xf32>
    %cst_10 = arith.constant 2.500000e-01 : f32
    %31 = vector.broadcast %cst_10 : f32 to vector<16x128xf32>
    %32 = arith.mulf %31, %30 : vector<16x128xf32>
    %33 = arith.mulf %32, %24 : vector<16x128xf32>
    %34 = vector.shape_cast %33 : vector<16x128xf32> to vector<2x8x128xf32>
    %cst_11 = arith.constant dense<0.000000e+00> : vector<8x128xf32>
    %35 = vector.multi_reduction <add>, %34, %cst_11 [0] : vector<2x8x128xf32> to vector<8x128xf32>
    %36 = arith.addf %3, %35 : vector<8x128xf32>
    %c1_i32 = arith.constant 1 : i32
    %c0_12 = arith.constant 0 : index
    %c0_13 = arith.constant 0 : index
    %37 = vector.load %arg4[%c0_12, %c0_13] : memref<8x128xf32, #tpu.memory_space<vmem>>, vector<8x128xf32>
    %38 = arith.addf %37, %36 : vector<8x128xf32>
    %c0_14 = arith.constant 0 : index
    %c0_15 = arith.constant 0 : index
    %39 = vector.load %arg4[%c0_14, %c0_15] : memref<8x128xf32, #tpu.memory_space<vmem>>, vector<8x128xf32>
    tpu.vector_store %arg4[%c0_14, %c0_15], %38 {strides = array<i32>} : memref<8x128xf32, #tpu.memory_space<vmem>>, vector<8x128xf32>,
    return
  }
  func.func @transform_0(%arg0: i32, %arg1: i32) -> (i32, i32) {
    %c1_i32 = arith.constant 1 : i32
    %0 = arith.muli %arg0, %c1_i32 : i32
    %1 = arith.addi %0, %arg1 : i32
    %c0_i32 = arith.constant 0 : i32
    %2 = arith.minsi %1, %c0_i32 : i32
    %c0_i32_0 = arith.constant 0 : i32
    %c0_i32_1 = arith.constant 0 : i32
    return %2, %c0_i32_0 : i32, i32
  }
  func.func @transform_1(%arg0: i32, %arg1: i32) -> (i32, i32) {
    %c1_i32 = arith.constant 1 : i32
    %0 = arith.muli %arg0, %c1_i32 : i32
    %1 = arith.addi %0, %arg1 : i32
    %c0_i32 = arith.constant 0 : i32
    %2 = arith.minsi %1, %c0_i32 : i32
    %c0_i32_0 = arith.constant 0 : i32
    %c0_i32_1 = arith.constant 0 : i32
    return %2, %c0_i32_0 : i32, i32
  }
  func.func @transform_2(%arg0: i32, %arg1: i32) -> (i32, i32) {
    %c0_i32 = arith.constant 0 : i32
    %c0_i32_0 = arith.constant 0 : i32
    return %arg0, %c0_i32 : i32, i32
  }
}

</mosaic_0001>

<llo_original>
// kernel: tpu_custom_call.1
$region0: #{tpu_custom_call.1}
  #allocation0 [shape = 'u32[]', space=smem, size = 0x4, offset = 0x4, fixed_abs, tag = 'smem constant byte address 0x4 - core index']
  #allocation1 [shape = 'u32[144,128]{1,0:T(1,128)}', space=vmem, size = 0x12000, scoped, tag = 'internal scratch']
  %s0 = inlined_call_operand.hbm [shape: f32[16,128], index: 0, kind: input, shape index: {}]
  %s1 = inlined_call_operand.hbm [shape: f32[16,128], index: 1, kind: input, shape index: {}]
  %s2 = inlined_call_operand.hbm [shape: f32[8,128], index: 2, kind: output, shape index: {}]
  %s3 = sld [smem:[#allocation0]]
  $region30: #{tpu_custom_call.1} parent=0
    _
  %s5 = ssub.s32 1, %s3
  %s6 = scalar_select 0, %s5, %s3
  $region1: #{tpu_custom_call.1} parent=0
    #allocation2 [shape = 'u8[8192]{0}', space=vmem, size = 0x2000, scoped, tag = 'input window, operand 0, single buffered']
    #allocation3 [shape = 's32[1]{0}', space=sflag, size = 0x4, scoped, tag = 'scoped memory for tpu_custom_call.1']
    #allocation4 [shape = 's32[1]{0}', space=sflag, size = 0x4, scoped, tag = 'scoped memory for tpu_custom_call.1']
    #allocation5 [shape = 'u8[8192]{0}', space=vmem, size = 0x2000, scoped, tag = 'input window, operand 1, single buffered']
    #allocation6 [shape = 's32[1]{0}', space=sflag, size = 0x4, scoped, tag = 'scoped memory for tpu_custom_call.1']
    #allocation7 [shape = 'u8[4096]{0}', space=vmem, size = 0x1000, scoped, tag = 'output window, operand 0, single buffered']
    %7 = vsyncpa [#allocation3], 0
    %8 = vsyncpa [#allocation6], 0
    %9 = vsyncpa [#allocation4], 0
    // Predicated region
    $region2: #{tpu_custom_call.1} parent=1 // pred_check
      _
    $region3: #{tpu_custom_call.1} parent=1 // pred_check_branch
      %11 = sbr.rel (0) target = $region5
    $region4: #{tpu_custom_call.1} parent=1 // pred_region
      %s12 = sadd.s32 0, 0
      %p13 = scmp.lt.s32.totalorder %s12, 0
      %s14 = scalar_select %p13, %s12, 0
      %s15 = smul.u32 2, %s14
      %s17 = ssub.s32 256, 256
      %18 = vsyncadd [#allocation3], %s17
      %s19 = smul.addr %s15, 128
      %s20 = scalar_lea.hbm %s0, %s19
      %s21 = sshll.u32 [#allocation2], 4
      %s22 = int_to_ptr.vmem [resolvable:$true] %s21
      %27 = dma.hbm_to_vmem [thread:$0]  %s20, 256, %s22, [#allocation3], 128, 128, 8
    $region5: #{tpu_custom_call.1} parent=1 // pred_fallthru
      _
    // Predicated region
    $region6: #{tpu_custom_call.1} parent=1 // pred_check
      _
    $region7: #{tpu_custom_call.1} parent=1 // pred_check_branch
      %29 = sbr.rel (0) target = $region9
    $region8: #{tpu_custom_call.1} parent=1 // pred_region
      %s30 = sadd.s32 0, 0
      %p31 = scmp.lt.s32.totalorder %s30, 0
      %s32 = scalar_select %p31, %s30, 0
      %s33 = smul.u32 2, %s32
      %s35 = ssub.s32 256, 256
      %36 = vsyncadd [#allocation6], %s35
      %s37 = smul.addr %s33, 128
      %s38 = scalar_lea.hbm %s1, %s37
      %s39 = sshll.u32 [#allocation5], 4
      %s40 = int_to_ptr.vmem [resolvable:$true] %s39
      %45 = dma.hbm_to_vmem [thread:$0]  %s38, 256, %s40, [#allocation6], 128, 128, 8
    $region9: #{tpu_custom_call.1} parent=1 // pred_fallthru
      _
    // Predicated region
    $region10: #{tpu_custom_call.1} parent=1 // pred_check
      _
    $region11: #{tpu_custom_call.1} parent=1 // pred_check_branch
      %47 = sbr.rel (0) target = $region13
    $region12: #{tpu_custom_call.1} parent=1 // pred_region
      %48 = dma.done [#allocation3], 256
    $region13: #{tpu_custom_call.1} parent=1 // pred_fallthru
      _
    // Predicated region
    $region14: #{tpu_custom_call.1} parent=1 // pred_check
      _
    $region15: #{tpu_custom_call.1} parent=1 // pred_check_branch
      %50 = sbr.rel (0) target = $region17
    $region16: #{tpu_custom_call.1} parent=1 // pred_region
      %51 = dma.done [#allocation6], 256
    $region17: #{tpu_custom_call.1} parent=1 // pred_fallthru
      _
    %s52 = sadd.s32 0, 0
    %p53 = scmp.lt.s32.totalorder %s52, 0
    %s54 = scalar_select %p53, %s52, 0
    %s55 = smul.u32 2, %s54
    %s56 = sadd.s32 0, 0
    %p57 = scmp.lt.s32.totalorder %s56, 0
    %s58 = scalar_select %p57, %s56, 0
    %s59 = smul.u32 2, %s58
    %p60 = scmp.eq.s32.totalorder 0, 0
    // Predicated region
    $region18: #{tpu_custom_call.1} parent=1 // pred_check
      %p61 = pneg %p60
    $region19: #{tpu_custom_call.1} parent=1 // pred_check_branch
      %63 = sbr.rel (%p61) target = $region21
    $region20: #{tpu_custom_call.1} parent=1 // pred_region
      %64 = vst [vmem:[#allocation7] sm:$0xff] 0.0
    $region21: #{tpu_custom_call.1} parent=1 // pred_fallthru
      _
    %v65 = vld [vmem:[#allocation2] sm:$0xff]
    %v66 = vld [vmem:[#allocation2 + $0x8] sm:$0xff]
    %v67 = vld [vmem:[#allocation5] sm:$0xff]
    %v68 = vld [vmem:[#allocation5 + $0x8] sm:$0xff]
    %v69 = vlog2.pop %v65
    %v70 = vmul.f32 %v69, 0.6931472
    %v71 = vlog2.pop %v66
    %v72 = vmul.f32 %v71, 0.6931472
    %v73 = vmax.f32 %v70, -100.0
    %v74 = vmax.f32 %v72, -100.0
    %v75 = vsub.f32 1.0, %v65
    %v76 = vsub.f32 1.0, %v66
    %v77 = vlog2.pop %v75
    %v78 = vmul.f32 %v77, 0.6931472
    %v79 = vlog2.pop %v76
    %v80 = vmul.f32 %v79, 0.6931472
    %v81 = vmax.f32 %v78, -100.0
    %v82 = vmax.f32 %v80, -100.0
    %v83 = vmul.f32 %v67, %v73
    %v84 = vmul.f32 %v68, %v74
    %v85 = vsub.f32 1.0, %v67
    %v86 = vsub.f32 1.0, %v68
    %v87 = vmul.f32 %v85, %v81
    %v88 = vmul.f32 %v86, %v82
    %v89 = vadd.f32 %v83, %v87
    %v90 = vadd.f32 %v84, %v88
    %v91 = vsub.f32 0.0, %v89
    %v92 = vsub.f32 0.0, %v90
    %v93 = vsub.f32 0.0, %v91
    %v94 = vsub.f32 0.0, %v92
    %v95 = vmul.f32 %v93, 1.442695
    %v96 = vpow.pop %v95
    %v97 = vmul.f32 %v94, 1.442695
    %v98 = vpow.pop %v97
    %v99 = vsub.f32 1.0, %v96
    %v100 = vsub.f32 1.0, %v98
    %v101 = vmul.f32 %v99, %v99
    %v102 = vmul.f32 %v100, %v100
    %v103 = vmul.f32 %v101, 0.25
    %v104 = vmul.f32 %v102, 0.25
    %v105 = vmul.f32 %v103, %v91
    %v106 = vmul.f32 %v104, %v92
    %v107 = vadd.f32 %v105, %v106
    %v108 = vadd.f32 %v107, 0.0
    %v109 = vld [vmem:[#allocation7] sm:$0xff]
    %v110 = vadd.f32 %v109, %v108
    %111 = vst [vmem:[#allocation7] sm:$0xff] %v110
    // Predicated region
    $region22: #{tpu_custom_call.1} parent=1 // pred_check
      _
    $region23: #{tpu_custom_call.1} parent=1 // pred_check_branch
      %113 = sbr.rel (0) target = $region25
    $region24: #{tpu_custom_call.1} parent=1 // pred_region
      %s115 = ssub.s32 128, 128
      %116 = vsyncadd [#allocation4], %s115
      %s118 = sshll.u32 [#allocation7], 4
      %s119 = int_to_ptr.vmem [resolvable:$true] %s118
      %121 = dma.vmem_to_hbm [thread:$0]  %s119, 128, %s2, [#allocation4]
    $region25: #{tpu_custom_call.1} parent=1 // pred_fallthru
      _
    // Predicated region
    $region26: #{tpu_custom_call.1} parent=1 // pred_check
      _
    $region27: #{tpu_custom_call.1} parent=1 // pred_check_branch
      %123 = sbr.rel (0) target = $region29
    $region28: #{tpu_custom_call.1} parent=1 // pred_region
      %124 = dma.done [#allocation4], 128
    $region29: #{tpu_custom_call.1} parent=1 // pred_fallthru
      _
    %125 = vsyncpa [#allocation3], 1
    %126 = vsyncpa [#allocation6], 1
    %127 = vsyncpa [#allocation4], 1

</llo_original>
